<compile_context>
chip_gen: v5e
topology: v5e:2x2
jax: 0.10.0
libtpu: 0.0.40
codegen_flags: <defaults>
</compile_context>

<pallas_src>
import functools

import jax
import jax.numpy as jnp
from jax import lax
from jax.experimental import pallas as pl
from jax.experimental.pallas import tpu as pltpu

_EPS = 1e-5
_TILE_BYTES = 6 * 1024 * 1024      # target HBM bytes per input DMA tile (per grid step)
_CHUNK_BYTES = 512 * 1024          # target f32 bytes per in-kernel compute chunk
_VMEM_LIMIT = 40 * 1024 * 1024     # 2x(in+out) double buffers + chunk temporaries; OK on v5e/v6e/v7x


def _round_up(a, b):
    return ((a + b - 1) // b) * b


def _round_down(a, b):
    return (a // b) * b


def _cdiv(a, b):
    return -(-a // b)


def _sublane_multiple(dtype):
    return {4: 8, 2: 16, 1: 32}.get(jnp.dtype(dtype).itemsize, 8)


@functools.cache
def _prefer_mxu_segsum():
    """MXU block-diag segmented sum on v6e/v7x; XLU roll ladder on v5-class and
    older chips (their f32-equivalent MXU throughput would make this memory-bound
    kernel MXU-bound, while 3 XLUs + lower HBM bandwidth keep the ladder free)."""
    try:
        kind = jax.devices()[0].device_kind.lower()
    except Exception:
        return True
    return not any(v in kind for v in ("v2", "v3", "v4", "v5"))


def _pick_tiling(rows, lane_elems, dtype):
    """Pick (tile_rows, chunk_rows).

    tile_rows  : rows per grid step (DMA tile, ~_TILE_BYTES of HBM bytes,
                 only the last grid block may be partial).
    chunk_rows : rows per in-kernel compute step (bounds the f32 temporaries to
                 ~_CHUNK_BYTES each); tile_rows is a multiple of chunk_rows.
    """
    sub = _sublane_multiple(dtype)
    itemsize = jnp.dtype(dtype).itemsize
    hbm_row_bytes = lane_elems * itemsize                 # real HBM bytes per row
    f32_row_bytes = _round_up(lane_elems, 128) * 4        # VMEM f32 working-set per row
    if rows <= sub:
        return rows, rows                                  # single full block, single chunk
    chunk = max(sub, _round_down(_CHUNK_BYTES // f32_row_bytes, sub))
    chunk = min(chunk, _round_down(rows, sub))             # only the LAST grid block is partial
    k = max(1, _TILE_BYTES // (chunk * hbm_row_bytes))
    k = min(k, max(1, _cdiv(_cdiv(rows, 2), chunk)))       # keep >= 2 grid steps when possible
    return chunk * k, chunk


def _map_chunks(body, x_ref, o_ref, chunk, n_chunks):
    """Apply `body` to chunk-row slices of the current block.

    A real loop (lax.fori_loop, not a Python for) bounds the live ranges of the
    per-chunk f32 temporaries so large DMA tiles don't blow up VMEM."""
    if n_chunks == 1:
        o_ref[...] = body(x_ref[...])
        return

    def step(i, carry):
        r = pl.multiple_of(i * chunk, chunk)
        o_ref[pl.ds(r, chunk), :] = body(x_ref[pl.ds(r, chunk), :])
        return carry

    lax.fori_loop(0, n_chunks, step, 0)


def _window_sum_pow2(x, width, backward):
    """Cyclic sliding-window sum of `width` (a power of two) along the last axis,
    built as a log2(width) roll-and-add ladder (XLU only; MXU stays idle)."""
    lanes = x.shape[-1]
    acc = x
    shift = 1
    while shift < width:
        s = (-shift if backward else shift) % lanes
        acc = acc + pltpu.roll(acc, s, acc.ndim - 1)
        shift *= 2
    return acc


def _packed_mxu_kernel(x_ref, w_ref, b_ref, o_ref, *, c, chunk, n_chunks):
    """Lane-packed path (v6e/v7x): segmented moments on the MXU.

    Each 128-lane row holds 128 // c tokens.  b_ref is the (128,128)
    block-diagonal-ones matrix with block size c, so x @ B is the per-token sum
    already broadcast to every lane of its segment.  precision=HIGHEST keeps the
    sums f32-accurate."""
    inv_c = 1.0 / c
    w = w_ref[...].astype(jnp.float32)        # (1, 128) weight tiled per token slot
    b = b_ref[...]                            # (128, 128) block-diag ones, f32

    def body(x):
        x = x.astype(jnp.float32)
        s1 = jnp.dot(x, b, preferred_element_type=jnp.float32,
                     precision=jax.lax.Precision.HIGHEST)
        s2 = jnp.dot(x * x, b, preferred_element_type=jnp.float32,
                     precision=jax.lax.Precision.HIGHEST)
        mu = s1 * inv_c
        var = jnp.maximum(s2 * inv_c - mu * mu, 0.0)
        return (x * (lax.rsqrt(var + _EPS) * w)).astype(o_ref.dtype)

    _map_chunks(body, x_ref, o_ref, chunk, n_chunks)


def _packed_ladder_kernel(x_ref, w_ref, o_ref, *, c, chunk, n_chunks):
    """Lane-packed path (v5-class): XLU roll-and-add ladders, no MXU.

    pltpu.roll follows the jnp.roll convention (positive shift moves data toward
    higher lane indices), so a forward width-c cyclic window sum leaves the exact
    per-token sum on the LAST lane of each c-wide segment.  s1/s2 are reduced to
    those anchor lanes, 1/sigma is formed there, and a single backward ladder
    broadcasts it to the whole segment (3 ladders instead of 4)."""
    lanes = x_ref.shape[-1]
    inv_c = 1.0 / c
    w = w_ref[...].astype(jnp.float32)                        # (1, lanes)
    lane = lax.broadcasted_iota(jnp.int32, (1, lanes), 1)
    anchor = (lane % c == c - 1).astype(jnp.float32)          # (1, lanes) anchor-lane mask

    def body(x):
        x = x.astype(jnp.float32)
        s1 = _window_sum_pow2(x, c, backward=False)
        s2 = _window_sum_pow2(x * x, c, backward=False)
        mu = s1 * inv_c
        var = jnp.maximum(s2 * inv_c - mu * mu, 0.0)          # clamp also keeps rsqrt finite
        inv_sigma = lax.rsqrt(var + _EPS) * anchor            # valid only on anchor lanes
        inv_sigma = _window_sum_pow2(inv_sigma, c, backward=True)   # broadcast to segment
        return (x * (inv_sigma * w)).astype(o_ref.dtype)

    _map_chunks(body, x_ref, o_ref, chunk, n_chunks)


def _rowwise_kernel(x_ref, w_ref, o_ref, *, c, chunk, n_chunks):
    """General path: one token per row; fused single-pass moments across lanes."""
    inv_c = 1.0 / c
    w = w_ref[...].astype(jnp.float32)                        # (1, c)

    def body(x):
        x = x.astype(jnp.float32)
        s1 = jnp.sum(x, axis=-1, keepdims=True)
        s2 = jnp.sum(x * x, axis=-1, keepdims=True)
        mu = s1 * inv_c
        var = jnp.maximum(s2 * inv_c - mu * mu, 0.0)
        return (x * (lax.rsqrt(var + _EPS) * w)).astype(o_ref.dtype)

    _map_chunks(body, x_ref, o_ref, chunk, n_chunks)


def bias_free_layer_norm(x, weight):
    """x: (..., C), weight: (C,).  Returns the same shape/dtype as x."""
    c = x.shape[-1]
    assert weight.shape == (c,)
    orig_shape = x.shape
    x2 = x.reshape(-1, c)
    n = x2.shape[0]

    compiler_params = pltpu.CompilerParams(
        # Row axis is embarrassingly parallel -> lets v7x's 2 TensorCores split
        # the grid (no effect on single-TC v5e/v6e).
        dimension_semantics=("parallel",),
        vmem_limit_bytes=_VMEM_LIMIT,
    )

    g = 128 // c if (0 < c < 128 and 128 % c == 0) else 0
    packed = g > 1 and n % g == 0          # lane-dense path; no pad/slice ever needed

    if packed:
        lanes = 128
        rows = n // g
        xp = x2.reshape(rows, lanes)       # free row-major reshape (g tokens per row)
        tr, chunk = _pick_tiling(rows, lanes, x.dtype)
        n_chunks = tr // chunk
        grid = (_cdiv(rows, tr),)          # partial last block handled by Pallas masking
        w_row = jnp.tile(weight, g).reshape(1, lanes)

        in_specs = [
            pl.BlockSpec((tr, lanes), lambda i: (i, 0)),      # packed tokens
            pl.BlockSpec((1, lanes), lambda i: (0, 0)),       # weight (resident)
        ]
        operands = [xp, w_row]
        if _prefer_mxu_segsum():
            idx = jnp.arange(lanes) // c
            bmat = (idx[:, None] == idx[None, :]).astype(jnp.float32)  # block-diag ones
            in_specs.append(pl.BlockSpec((lanes, lanes), lambda i: (0, 0)))
            operands.append(bmat)
            kern = functools.partial(_packed_mxu_kernel, c=c, chunk=chunk,
                                     n_chunks=n_chunks)
        else:
            kern = functools.partial(_packed_ladder_kernel, c=c, chunk=chunk,
                                     n_chunks=n_chunks)

        out = pl.pallas_call(
            kern,
            out_shape=jax.ShapeDtypeStruct((rows, lanes), x.dtype),
            grid_spec=pltpu.PrefetchScalarGridSpec(
                num_scalar_prefetch=0,
                grid=grid,
                in_specs=in_specs,
                out_specs=pl.BlockSpec((tr, lanes), lambda i: (i, 0)),
            ),
            compiler_params=compiler_params,
        )(*operands)
        out = out.reshape(n, c)
    else:
        rows = n
        tr, chunk = _pick_tiling(rows, c, x.dtype)
        n_chunks = tr // chunk
        grid = (_cdiv(rows, tr),)          # partial last block handled by Pallas masking
        w_row = weight.reshape(1, c)

        out = pl.pallas_call(
            functools.partial(_rowwise_kernel, c=c, chunk=chunk, n_chunks=n_chunks),
            out_shape=jax.ShapeDtypeStruct((rows, c), x.dtype),
            grid_spec=pltpu.PrefetchScalarGridSpec(
                num_scalar_prefetch=0,
                grid=grid,
                in_specs=[
                    pl.BlockSpec((tr, c), lambda i: (i, 0)),
                    pl.BlockSpec((1, c), lambda i: (0, 0)),
                ],
                out_specs=pl.BlockSpec((tr, c), lambda i: (i, 0)),
            ),
            compiler_params=compiler_params,
        )(x2, w_row)

    return out.reshape(orig_shape)


def _reference(x, weight):
    xf = x.astype(jnp.float32)
    mu = jnp.mean(xf, axis=-1, keepdims=True)
    var = jnp.mean((xf - mu) ** 2, axis=-1, keepdims=True)
    return (xf / jnp.sqrt(var + _EPS) * weight.astype(jnp.float32)).astype(x.dtype)


if __name__ == "__main__":
    key = jax.random.PRNGKey(0)
    # (batch, tokens, channels); LayerNorm over the channel dim, as in Restormer.
    cases = [
        ((2, 64, 32), jnp.float32),    # packed lane-dense path (4 tokens / 128-lane row)
        ((1, 50, 32), jnp.float32),    # n % g != 0 -> rowwise fallback, partial last grid block
        ((2, 8, 48), jnp.float32),     # C does not divide 128 -> rowwise path
        ((2, 64, 64), jnp.bfloat16),   # packed path with bf16 I/O, f32 accumulation
        ((1, 32, 256), jnp.float32),   # C multiple of 128 -> rowwise path, fully lane-dense
    ]
    for shape, dtype in cases:
        c = shape[-1]
        key, kx, kw = jax.random.split(key, 3)
        x = jax.random.normal(kx, shape, dtype=jnp.float32).astype(dtype)
        # Module init is torch.ones(C); use a non-trivial weight to exercise the scale.
        weight = 1.0 + 0.1 * jax.random.normal(kw, (c,), dtype=jnp.float32)

        out = jax.block_until_ready(bias_free_layer_norm(x, weight))
        ref = _reference(x, weight)
        assert out.shape == x.shape and out.dtype == x.dtype
        tol = 3e-5 if dtype == jnp.float32 else 2e-2
        assert jnp.allclose(out.astype(jnp.float32), ref.astype(jnp.float32),
                            atol=tol, rtol=tol), f"mismatch for {shape} {dtype}"
    print("KERNEL_OK")
</pallas_src>

<mosaic_0001>
module attributes {stable_mosaic.version = 11 : i64} {
  func.func @_packed_mxu_kernel(%arg0: i32, %arg1: memref<32x128xf32, #tpu.memory_space<vmem>>, %arg2: memref<1x128xf32, #tpu.memory_space<vmem>>, %arg3: memref<128x128xf32, #tpu.memory_space<vmem>>, %arg4: memref<32x128xf32, #tpu.memory_space<vmem>>) attributes {dimension_semantics = [#tpu.dimension_semantics<parallel>], iteration_bounds = array<i64: 1>, scalar_prefetch = 0 : i64, scratch_operands = 0 : i64, tpu.core_type = #tpu.core_type<tc>, window_params = [{transform_indices = @transform_0, window_bounds = array<i64: 32, 128>}, {pipeline_mode = #tpu.pipeline_mode<synchronous>, transform_indices = @transform_1, window_bounds = array<i64: 1, 128>}, {pipeline_mode = #tpu.pipeline_mode<synchronous>, transform_indices = @transform_2, window_bounds = array<i64: 128, 128>}, {transform_indices = @transform_3, window_bounds = array<i64: 32, 128>}]} {
    %c0 = arith.constant 0 : index
    %c0_0 = arith.constant 0 : index
    %0 = vector.load %arg2[%c0, %c0_0] : memref<1x128xf32, #tpu.memory_space<vmem>>, vector<1x128xf32>
    %c0_1 = arith.constant 0 : index
    %c0_2 = arith.constant 0 : index
    %1 = vector.load %arg3[%c0_1, %c0_2] : memref<128x128xf32, #tpu.memory_space<vmem>>, vector<128x128xf32>
    %c0_3 = arith.constant 0 : index
    %c0_4 = arith.constant 0 : index
    %2 = vector.load %arg1[%c0_3, %c0_4] : memref<32x128xf32, #tpu.memory_space<vmem>>, vector<32x128xf32>
    %cst = arith.constant dense<0.000000e+00> : vector<32x128xf32>
    %3 = tpu.matmul %2, %1, %cst {dimension_numbers = #tpu.dot_dimension_numbers<[1], [0], [0], [1], [0, 0, 1, 1], [], []>, precision = #tpu.contract_precision<fp32>} : vector<32x128xf32>, vector<128x128xf32>, vector<32x128xf32> -> vector<32x128xf32>
    %4 = arith.mulf %2, %2 : vector<32x128xf32>
    %cst_5 = arith.constant dense<0.000000e+00> : vector<32x128xf32>
    %5 = tpu.matmul %4, %1, %cst_5 {dimension_numbers = #tpu.dot_dimension_numbers<[1], [0], [0], [1], [0, 0, 1, 1], [], []>, precision = #tpu.contract_precision<fp32>} : vector<32x128xf32>, vector<128x128xf32>, vector<32x128xf32> -> vector<32x128xf32>
    %cst_6 = arith.constant 3.125000e-02 : f32
    %6 = vector.broadcast %cst_6 : f32 to vector<32x128xf32>
    %7 = arith.mulf %3, %6 : vector<32x128xf32>
    %cst_7 = arith.constant 3.125000e-02 : f32
    %8 = vector.broadcast %cst_7 : f32 to vector<32x128xf32>
    %9 = arith.mulf %5, %8 : vector<32x128xf32>
    %10 = arith.mulf %7, %7 : vector<32x128xf32>
    %11 = arith.subf %9, %10 : vector<32x128xf32>
    %cst_8 = arith.constant 0.000000e+00 : f32
    %12 = vector.broadcast %cst_8 : f32 to vector<32x128xf32>
    %13 = arith.maximumf %11, %12 : vector<32x128xf32>
    %cst_9 = arith.constant 9.99999974E-6 : f32
    %14 = vector.broadcast %cst_9 : f32 to vector<32x128xf32>
    %15 = arith.addf %13, %14 : vector<32x128xf32>
    %16 = math.rsqrt %15 : vector<32x128xf32>
    %17 = vector.broadcast %0 : vector<1x128xf32> to vector<32x128xf32>
    %18 = arith.mulf %16, %17 : vector<32x128xf32>
    %19 = arith.mulf %2, %18 : vector<32x128xf32>
    %c0_10 = arith.constant 0 : index
    %c0_11 = arith.constant 0 : index
    %20 = vector.load %arg4[%c0_10, %c0_11] : memref<32x128xf32, #tpu.memory_space<vmem>>, vector<32x128xf32>
    tpu.vector_store %arg4[%c0_10, %c0_11], %19 {strides = array<i32>} : memref<32x128xf32, #tpu.memory_space<vmem>>, vector<32x128xf32>,
    return
  }
  func.func @transform_0(%arg0: i32) -> (i32, i32) {
    %c0_i32 = arith.constant 0 : i32
    %c0_i32_0 = arith.constant 0 : i32
    return %arg0, %c0_i32 : i32, i32
  }
  func.func @transform_1(%arg0: i32) -> (i32, i32) {
    %c0_i32 = arith.constant 0 : i32
    %c0_i32_0 = arith.constant 0 : i32
    %c0_i32_1 = arith.constant 0 : i32
    return %c0_i32, %c0_i32_0 : i32, i32
  }
  func.func @transform_2(%arg0: i32) -> (i32, i32) {
    %c0_i32 = arith.constant 0 : i32
    %c0_i32_0 = arith.constant 0 : i32
    %c0_i32_1 = arith.constant 0 : i32
    return %c0_i32, %c0_i32_0 : i32, i32
  }
  func.func @transform_3(%arg0: i32) -> (i32, i32) {
    %c0_i32 = arith.constant 0 : i32
    %c0_i32_0 = arith.constant 0 : i32
    return %arg0, %c0_i32 : i32, i32
  }
}

</mosaic_0001>

<llo_original>
// kernel: tpu_custom_call.1
$region0: #{tpu_custom_call.1}
  #allocation0 [shape = 'u32[]', space=smem, size = 0x4, offset = 0x4, fixed_abs, tag = 'smem constant byte address 0x4 - core index']
  #allocation1 [shape = 'u32[72,128]{1,0:T(1,128)}', space=vmem, size = 0x9000, scoped, tag = 'internal scratch']
  %s0 = inlined_call_operand.hbm [shape: f32[32,128], index: 0, kind: input, shape index: {}]
  %s1 = inlined_call_operand.hbm [shape: f32[1,128], index: 1, kind: input, shape index: {}]
  %s2 = inlined_call_operand.hbm [shape: f32[128,128], index: 2, kind: input, shape index: {}]
  %s3 = inlined_call_operand.hbm [shape: f32[32,128], index: 3, kind: output, shape index: {}]
  %s4 = sld [smem:[#allocation0]]
  $region34: #{tpu_custom_call.1} parent=0
    _
  %s6 = ssub.s32 1, %s4
  %s7 = scalar_select 0, %s6, %s4
  $region1: #{tpu_custom_call.1} parent=0
    #allocation2 [shape = 'u8[16384]{0}', space=vmem, size = 0x4000, scoped, tag = 'input window, operand 0, single buffered']
    #allocation3 [shape = 's32[1]{0}', space=sflag, size = 0x4, scoped, tag = 'scoped memory for tpu_custom_call.1']
    #allocation4 [shape = 's32[1]{0}', space=sflag, size = 0x4, scoped, tag = 'scoped memory for tpu_custom_call.1']
    #allocation5 [shape = 'u8[512]{0}', space=vmem, size = 0x400, scoped, tag = 'input window, operand 1, single buffered']
    #allocation6 [shape = 's32[1]{0}', space=sflag, size = 0x4, scoped, tag = 'scoped memory for tpu_custom_call.1']
    #allocation7 [shape = 'u8[65536]{0}', space=vmem, size = 0x10000, scoped, tag = 'input window, operand 2, single buffered']
    #allocation8 [shape = 'u8[16384]{0}', space=vmem, size = 0x4000, scoped, tag = 'output window, operand 0, single buffered']
    %8 = vsyncpa [#allocation3], 0
    %9 = vsyncpa [#allocation6], 0
    %10 = vsyncpa [#allocation4], 0
    // Predicated region
    $region2: #{tpu_custom_call.1} parent=1 // pred_check
      _
    $region3: #{tpu_custom_call.1} parent=1 // pred_check_branch
      %12 = sbr.rel (0) target = $region5
    $region4: #{tpu_custom_call.1} parent=1 // pred_region
      %14 = vsyncadd [#allocation3], 0
      %s15 = sshll.u32 %s0, 4
      %s16 = int_to_ptr.hbm [resolvable:$true] %s15
      %s17 = sshll.u32 [#allocation2], 4
      %s18 = int_to_ptr.vmem [resolvable:$true] %s17
      %23 = dma.hbm_to_vmem [thread:$0]  %s16, 512, %s18, [#allocation3], 128, 128, 8
    $region5: #{tpu_custom_call.1} parent=1 // pred_fallthru
      _
    // Predicated region
    $region6: #{tpu_custom_call.1} parent=1 // pred_check
      _
    $region7: #{tpu_custom_call.1} parent=1 // pred_check_branch
      %25 = sbr.rel (0) target = $region9
    $region8: #{tpu_custom_call.1} parent=1 // pred_region
      %27 = vsyncadd [#allocation6], 0
      %s29 = sshll.u32 %s1, 4
      %s30 = int_to_ptr.hbm [resolvable:$true] %s29
      %s31 = sshll.u32 [#allocation5], 4
      %s32 = int_to_ptr.vmem [resolvable:$true] %s31
      %34 = dma.hbm_to_vmem [thread:$0]  %s30, 16, %s32, [#allocation6]
    $region9: #{tpu_custom_call.1} parent=1 // pred_fallthru
      _
    // Predicated region
    $region10: #{tpu_custom_call.1} parent=1 // pred_check
      _
    $region11: #{tpu_custom_call.1} parent=1 // pred_check_branch
      %36 = sbr.rel (0) target = $region13
    $region12: #{tpu_custom_call.1} parent=1 // pred_region
      %38 = vsyncadd [#allocation6], 0
      %s39 = sshll.u32 %s2, 4
      %s40 = int_to_ptr.hbm [resolvable:$true] %s39
      %s41 = sshll.u32 [#allocation7], 4
      %s42 = int_to_ptr.vmem [resolvable:$true] %s41
      %47 = dma.hbm_to_vmem [thread:$0]  %s40, 2048, %s42, [#allocation6], 128, 128, 8
    $region13: #{tpu_custom_call.1} parent=1 // pred_fallthru
      _
    // Predicated region
    $region14: #{tpu_custom_call.1} parent=1 // pred_check
      _
    $region15: #{tpu_custom_call.1} parent=1 // pred_check_branch
      %49 = sbr.rel (0) target = $region17
    $region16: #{tpu_custom_call.1} parent=1 // pred_region
      %51 = dma.done [#allocation3], 512
    $region17: #{tpu_custom_call.1} parent=1 // pred_fallthru
      _
    // Predicated region
    $region18: #{tpu_custom_call.1} parent=1 // pred_check
      _
    $region19: #{tpu_custom_call.1} parent=1 // pred_check_branch
      %53 = sbr.rel (0) target = $region21
    $region20: #{tpu_custom_call.1} parent=1 // pred_region
      %55 = dma.done [#allocation6], 16
    $region21: #{tpu_custom_call.1} parent=1 // pred_fallthru
      _
    // Predicated region
    $region22: #{tpu_custom_call.1} parent=1 // pred_check
      _
    $region23: #{tpu_custom_call.1} parent=1 // pred_check_branch
      %57 = sbr.rel (0) target = $region25
    $region24: #{tpu_custom_call.1} parent=1 // pred_region
      %59 = dma.done [#allocation6], 2048
    $region25: #{tpu_custom_call.1} parent=1 // pred_fallthru
      _
    %v60 = vld [vmem:[#allocation5] sm:$0x1]
    %v61 = vld [vmem:[#allocation7] sm:$0xff]
    %v62 = vld [vmem:[#allocation7 + $0x8] sm:$0xff]
    %v63 = vld [vmem:[#allocation7 + $0x10] sm:$0xff]
    %v64 = vld [vmem:[#allocation7 + $0x18] sm:$0xff]
    %v65 = vld [vmem:[#allocation7 + $0x20] sm:$0xff]
    %v66 = vld [vmem:[#allocation7 + $0x28] sm:$0xff]
    %v67 = vld [vmem:[#allocation7 + $0x30] sm:$0xff]
    %v68 = vld [vmem:[#allocation7 + $0x38] sm:$0xff]
    %v69 = vld [vmem:[#allocation7 + $0x40] sm:$0xff]
    %v70 = vld [vmem:[#allocation7 + $0x48] sm:$0xff]
    %v71 = vld [vmem:[#allocation7 + $0x50] sm:$0xff]
    %v72 = vld [vmem:[#allocation7 + $0x58] sm:$0xff]
    %v73 = vld [vmem:[#allocation7 + $0x60] sm:$0xff]
    %v74 = vld [vmem:[#allocation7 + $0x68] sm:$0xff]
    %v75 = vld [vmem:[#allocation7 + $0x70] sm:$0xff]
    %v76 = vld [vmem:[#allocation7 + $0x78] sm:$0xff]
    %v77 = vld [vmem:[#allocation2] sm:$0xff]
    %v78 = vld [vmem:[#allocation2 + $0x8] sm:$0xff]
    %v79 = vld [vmem:[#allocation2 + $0x10] sm:$0xff]
    %v80 = vld [vmem:[#allocation2 + $0x18] sm:$0xff]
    %v81 = vand.u32 %v76, 4294901760
    %82 = vmatpush.msra.mxu0 %v81
    %v83 = vand.u32 %v75, 4294901760
    %84 = vmatpush.msra.mxu0 %v83
    %v85 = vand.u32 %v74, 4294901760
    %86 = vmatpush.msra.mxu0 %v85
    %v87 = vand.u32 %v73, 4294901760
    %88 = vmatpush.msra.mxu0 %v87
    %v89 = vand.u32 %v72, 4294901760
    %90 = vmatpush.msra.mxu0 %v89
    %v91 = vand.u32 %v71, 4294901760
    %92 = vmatpush.msra.mxu0 %v91
    %v93 = vand.u32 %v70, 4294901760
    %94 = vmatpush.msra.mxu0 %v93
    %v95 = vand.u32 %v69, 4294901760
    %96 = vmatpush.msra.mxu0 %v95
    %v97 = vand.u32 %v68, 4294901760
    %98 = vmatpush.msra.mxu0 %v97
    %v99 = vand.u32 %v67, 4294901760
    %100 = vmatpush.msra.mxu0 %v99
    %v101 = vand.u32 %v66, 4294901760
    %102 = vmatpush.msra.mxu0 %v101
    %v103 = vand.u32 %v65, 4294901760
    %104 = vmatpush.msra.mxu0 %v103
    %v105 = vand.u32 %v64, 4294901760
    %106 = vmatpush.msra.mxu0 %v105
    %v107 = vand.u32 %v63, 4294901760
    %108 = vmatpush.msra.mxu0 %v107
    %v109 = vand.u32 %v62, 4294901760
    %110 = vmatpush.msra.mxu0 %v109
    %v111 = vand.u32 %v61, 4294901760
    %112 = vmatpush.msra.mxu0 %v111
    %v113 = vand.u32 %v77, 4294901760
    %v114 = vsub.f32 %v77, %v113
    %v115 = vand.u32 %v114, 4294901760
    %v116 = vsub.f32 %v114, %v115
    %v117 = vand.u32 %v116, 4294901760
    %118 = vmatmul.f32.gmra.mxu0 %v117
    %v119 = vpop.f32.mrf.mxu0
    %v120 = vadd.f32 0.0, %v119
    %v121 = vand.u32 %v78, 4294901760
    %v122 = vsub.f32 %v78, %v121
    %v123 = vand.u32 %v122, 4294901760
    %v124 = vsub.f32 %v122, %v123
    %v125 = vand.u32 %v124, 4294901760
    %126 = vmatmul.f32.gmra.mxu0 %v125
    %v127 = vpop.f32.mrf.mxu0
    %v128 = vadd.f32 0.0, %v127
    %v129 = vand.u32 %v79, 4294901760
    %v130 = vsub.f32 %v79, %v129
    %v131 = vand.u32 %v130, 4294901760
    %v132 = vsub.f32 %v130, %v131
    %v133 = vand.u32 %v132, 4294901760
    %134 = vmatmul.f32.gmra.mxu0 %v133
    %v135 = vpop.f32.mrf.mxu0
    %v136 = vadd.f32 0.0, %v135
    %v137 = vand.u32 %v80, 4294901760
    %v138 = vsub.f32 %v80, %v137
    %v139 = vand.u32 %v138, 4294901760
    %v140 = vsub.f32 %v138, %v139
    %v141 = vand.u32 %v140, 4294901760
    %142 = vmatmul.f32.gmra.mxu0 %v141
    %v143 = vpop.f32.mrf.mxu0
    %v144 = vadd.f32 0.0, %v143
    %145 = vdwg.mxu0
    %v146 = vand.u32 %v76, 4294901760
    %v147 = vsub.f32 %v76, %v146
    %v148 = vand.u32 %v147, 4294901760
    %v149 = vsub.f32 %v147, %v148
    %v150 = vand.u32 %v149, 4294901760
    %151 = vmatpush.msra.mxu0 %v150
    %v152 = vand.u32 %v75, 4294901760
    %v153 = vsub.f32 %v75, %v152
    %v154 = vand.u32 %v153, 4294901760
    %v155 = vsub.f32 %v153, %v154
    %v156 = vand.u32 %v155, 4294901760
    %157 = vmatpush.msra.mxu0 %v156
    %v158 = vand.u32 %v74, 4294901760
    %v159 = vsub.f32 %v74, %v158
    %v160 = vand.u32 %v159, 4294901760
    %v161 = vsub.f32 %v159, %v160
    %v162 = vand.u32 %v161, 4294901760
    %163 = vmatpush.msra.mxu0 %v162
    %v164 = vand.u32 %v73, 4294901760
    %v165 = vsub.f32 %v73, %v164
    %v166 = vand.u32 %v165, 4294901760
    %v167 = vsub.f32 %v165, %v166
    %v168 = vand.u32 %v167, 4294901760
    %169 = vmatpush.msra.mxu0 %v168
    %v170 = vand.u32 %v72, 4294901760
    %v171 = vsub.f32 %v72, %v170
    %v172 = vand.u32 %v171, 4294901760
    %v173 = vsub.f32 %v171, %v172
    %v174 = vand.u32 %v173, 4294901760
    %175 = vmatpush.msra.mxu0 %v174
    %v176 = vand.u32 %v71, 4294901760
    %v177 = vsub.f32 %v71, %v176
    %v178 = vand.u32 %v177, 4294901760
    %v179 = vsub.f32 %v177, %v178
    %v180 = vand.u32 %v179, 4294901760
    %181 = vmatpush.msra.mxu0 %v180
    %v182 = vand.u32 %v70, 4294901760
    %v183 = vsub.f32 %v70, %v182
    %v184 = vand.u32 %v183, 4294901760
    %v185 = vsub.f32 %v183, %v184
    %v186 = vand.u32 %v185, 4294901760
    %187 = vmatpush.msra.mxu0 %v186
    %v188 = vand.u32 %v69, 4294901760
    %v189 = vsub.f32 %v69, %v188
    %v190 = vand.u32 %v189, 4294901760
    %v191 = vsub.f32 %v189, %v190
    %v192 = vand.u32 %v191, 4294901760
    %193 = vmatpush.msra.mxu0 %v192
    %v194 = vand.u32 %v68, 4294901760
    %v195 = vsub.f32 %v68, %v194
    %v196 = vand.u32 %v195, 4294901760
    %v197 = vsub.f32 %v195, %v196
    %v198 = vand.u32 %v197, 4294901760
    %199 = vmatpush.msra.mxu0 %v198
    %v200 = vand.u32 %v67, 4294901760
    %v201 = vsub.f32 %v67, %v200
    %v202 = vand.u32 %v201, 4294901760
    %v203 = vsub.f32 %v201, %v202
    %v204 = vand.u32 %v203, 4294901760
    %205 = vmatpush.msra.mxu0 %v204
    %v206 = vand.u32 %v66, 4294901760
    %v207 = vsub.f32 %v66, %v206
    %v208 = vand.u32 %v207, 4294901760
    %v209 = vsub.f32 %v207, %v208
    %v210 = vand.u32 %v209, 4294901760
    %211 = vmatpush.msra.mxu0 %v210
    %v212 = vand.u32 %v65, 4294901760
    %v213 = vsub.f32 %v65, %v212
    %v214 = vand.u32 %v213, 4294901760
    %v215 = vsub.f32 %v213, %v214
    %v216 = vand.u32 %v215, 4294901760
    %217 = vmatpush.msra.mxu0 %v216
    %v218 = vand.u32 %v64, 4294901760
    %v219 = vsub.f32 %v64, %v218
    %v220 = vand.u32 %v219, 4294901760
    %v221 = vsub.f32 %v219, %v220
    %v222 = vand.u32 %v221, 4294901760
    %223 = vmatpush.msra.mxu0 %v222
    %v224 = vand.u32 %v63, 4294901760
    %v225 = vsub.f32 %v63, %v224
    %v226 = vand.u32 %v225, 4294901760
    %v227 = vsub.f32 %v225, %v226
    %v228 = vand.u32 %v227, 4294901760
    %229 = vmatpush.msra.mxu0 %v228
    %v230 = vand.u32 %v62, 4294901760
    %v231 = vsub.f32 %v62, %v230
    %v232 = vand.u32 %v231, 4294901760
    %v233 = vsub.f32 %v231, %v232
    %v234 = vand.u32 %v233, 4294901760
    %235 = vmatpush.msra.mxu0 %v234
    %v236 = vand.u32 %v61, 4294901760
    %v237 = vsub.f32 %v61, %v236
    %v238 = vand.u32 %v237, 4294901760
    %v239 = vsub.f32 %v237, %v238
    %v240 = vand.u32 %v239, 4294901760
    %241 = vmatpush.msra.mxu0 %v240
    %v242 = vand.u32 %v77, 4294901760
    %243 = vmatmul.f32.gmra.mxu0 %v242
    %v244 = vpop.f32.mrf.mxu0
    %v245 = vadd.f32 %v120, %v244
    %v246 = vand.u32 %v78, 4294901760
    %247 = vmatmul.f32.gmra.mxu0 %v246
    %v248 = vpop.f32.mrf.mxu0
    %v249 = vadd.f32 %v128, %v248
    %v250 = vand.u32 %v79, 4294901760
    %251 = vmatmul.f32.gmra.mxu0 %v250
    %v252 = vpop.f32.mrf.mxu0
    %v253 = vadd.f32 %v136, %v252
    %v254 = vand.u32 %v80, 4294901760
    %255 = vmatmul.f32.gmra.mxu0 %v254
    %v256 = vpop.f32.mrf.mxu0
    %v257 = vadd.f32 %v144, %v256
    %258 = vdwg.mxu0
    %v259 = vand.u32 %v76, 4294901760
    %v260 = vsub.f32 %v76, %v259
    %261 = vmatpush.msra.mxu0 %v260
    %v262 = vand.u32 %v75, 4294901760
    %v263 = vsub.f32 %v75, %v262
    %264 = vmatpush.msra.mxu0 %v263
    %v265 = vand.u32 %v74, 4294901760
    %v266 = vsub.f32 %v74, %v265
    %267 = vmatpush.msra.mxu0 %v266
    %v268 = vand.u32 %v73, 4294901760
    %v269 = vsub.f32 %v73, %v268
    %270 = vmatpush.msra.mxu0 %v269
    %v271 = vand.u32 %v72, 4294901760
    %v272 = vsub.f32 %v72, %v271
    %273 = vmatpush.msra.mxu0 %v272
    %v274 = vand.u32 %v71, 4294901760
    %v275 = vsub.f32 %v71, %v274
    %276 = vmatpush.msra.mxu0 %v275
    %v277 = vand.u32 %v70, 4294901760
    %v278 = vsub.f32 %v70, %v277
    %279 = vmatpush.msra.mxu0 %v278
    %v280 = vand.u32 %v69, 4294901760
    %v281 = vsub.f32 %v69, %v280
    %282 = vmatpush.msra.mxu0 %v281
    %v283 = vand.u32 %v68, 4294901760
    %v284 = vsub.f32 %v68, %v283
    %285 = vmatpush.msra.mxu0 %v284
    %v286 = vand.u32 %v67, 4294901760
    %v287 = vsub.f32 %v67, %v286
    %288 = vmatpush.msra.mxu0 %v287
    %v289 = vand.u32 %v66, 4294901760
    %v290 = vsub.f32 %v66, %v289
    %291 = vmatpush.msra.mxu0 %v290
    %v292 = vand.u32 %v65, 4294901760
    %v293 = vsub.f32 %v65, %v292
    %294 = vmatpush.msra.mxu0 %v293
    %v295 = vand.u32 %v64, 4294901760
    %v296 = vsub.f32 %v64, %v295
    %297 = vmatpush.msra.mxu0 %v296
    %v298 = vand.u32 %v63, 4294901760
    %v299 = vsub.f32 %v63, %v298
    %300 = vmatpush.msra.mxu0 %v299
    %v301 = vand.u32 %v62, 4294901760
    %v302 = vsub.f32 %v62, %v301
    %303 = vmatpush.msra.mxu0 %v302
    %v304 = vand.u32 %v61, 4294901760
    %v305 = vsub.f32 %v61, %v304
    %306 = vmatpush.msra.mxu0 %v305
    %v307 = vand.u32 %v77, 4294901760
    %v308 = vsub.f32 %v77, %v307
    %309 = vmatmul.f32.gmra.mxu0 %v308
    %v310 = vpop.f32.mrf.mxu0
    %v311 = vadd.f32 %v245, %v310
    %v312 = vand.u32 %v78, 4294901760
    %v313 = vsub.f32 %v78, %v312
    %314 = vmatmul.f32.gmra.mxu0 %v313
    %v315 = vpop.f32.mrf.mxu0
    %v316 = vadd.f32 %v249, %v315
    %v317 = vand.u32 %v79, 4294901760
    %v318 = vsub.f32 %v79, %v317
    %319 = vmatmul.f32.gmra.mxu0 %v318
    %v320 = vpop.f32.mrf.mxu0
    %v321 = vadd.f32 %v253, %v320
    %v322 = vand.u32 %v80, 4294901760
    %v323 = vsub.f32 %v80, %v322
    %324 = vmatmul.f32.gmra.mxu0 %v323
    %v325 = vpop.f32.mrf.mxu0
    %v326 = vadd.f32 %v257, %v325
    %327 = vdwg.mxu0
    %v328 = vand.u32 %v76, 4294901760
    %329 = vmatpush.msra.mxu0 %v328
    %v330 = vand.u32 %v75, 4294901760
    %331 = vmatpush.msra.mxu0 %v330
    %v332 = vand.u32 %v74, 4294901760
    %333 = vmatpush.msra.mxu0 %v332
    %v334 = vand.u32 %v73, 4294901760
    %335 = vmatpush.msra.mxu0 %v334
    %v336 = vand.u32 %v72, 4294901760
    %337 = vmatpush.msra.mxu0 %v336
    %v338 = vand.u32 %v71, 4294901760
    %339 = vmatpush.msra.mxu0 %v338
    %v340 = vand.u32 %v70, 4294901760
    %341 = vmatpush.msra.mxu0 %v340
    %v342 = vand.u32 %v69, 4294901760
    %343 = vmatpush.msra.mxu0 %v342
    %v344 = vand.u32 %v68, 4294901760
    %345 = vmatpush.msra.mxu0 %v344
    %v346 = vand.u32 %v67, 4294901760
    %347 = vmatpush.msra.mxu0 %v346
    %v348 = vand.u32 %v66, 4294901760
    %349 = vmatpush.msra.mxu0 %v348
    %v350 = vand.u32 %v65, 4294901760
    %351 = vmatpush.msra.mxu0 %v350
    %v352 = vand.u32 %v64, 4294901760
    %353 = vmatpush.msra.mxu0 %v352
    %v354 = vand.u32 %v63, 4294901760
    %355 = vmatpush.msra.mxu0 %v354
    %v356 = vand.u32 %v62, 4294901760
    %357 = vmatpush.msra.mxu0 %v356
    %v358 = vand.u32 %v61, 4294901760
    %359 = vmatpush.msra.mxu0 %v358
    %v360 = vand.u32 %v77, 4294901760
    %v361 = vsub.f32 %v77, %v360
    %v362 = vand.u32 %v361, 4294901760
    %363 = vmatmul.f32.gmra.mxu0 %v362
    %v364 = vpop.f32.mrf.mxu0
    %v365 = vadd.f32 %v311, %v364
    %v366 = vand.u32 %v78, 4294901760
    %v367 = vsub.f32 %v78, %v366
    %v368 = vand.u32 %v367, 4294901760
    %369 = vmatmul.f32.gmra.mxu0 %v368
    %v370 = vpop.f32.mrf.mxu0
    %v371 = vadd.f32 %v316, %v370
    %v372 = vand.u32 %v79, 4294901760
    %v373 = vsub.f32 %v79, %v372
    %v374 = vand.u32 %v373, 4294901760
    %375 = vmatmul.f32.gmra.mxu0 %v374
    %v376 = vpop.f32.mrf.mxu0
    %v377 = vadd.f32 %v321, %v376
    %v378 = vand.u32 %v80, 4294901760
    %v379 = vsub.f32 %v80, %v378
    %v380 = vand.u32 %v379, 4294901760
    %381 = vmatmul.f32.gmra.mxu0 %v380
    %v382 = vpop.f32.mrf.mxu0
    %v383 = vadd.f32 %v326, %v382
    %384 = vdwg.mxu0
    %v385 = vand.u32 %v76, 4294901760
    %v386 = vsub.f32 %v76, %v385
    %v387 = vand.u32 %v386, 4294901760
    %388 = vmatpush.msra.mxu0 %v387
    %v389 = vand.u32 %v75, 4294901760
    %v390 = vsub.f32 %v75, %v389
    %v391 = vand.u32 %v390, 4294901760
    %392 = vmatpush.msra.mxu0 %v391
    %v393 = vand.u32 %v74, 4294901760
    %v394 = vsub.f32 %v74, %v393
    %v395 = vand.u32 %v394, 4294901760
    %396 = vmatpush.msra.mxu0 %v395
    %v397 = vand.u32 %v73, 4294901760
    %v398 = vsub.f32 %v73, %v397
    %v399 = vand.u32 %v398, 4294901760
    %400 = vmatpush.msra.mxu0 %v399
    %v401 = vand.u32 %v72, 4294901760
    %v402 = vsub.f32 %v72, %v401
    %v403 = vand.u32 %v402, 4294901760
    %404 = vmatpush.msra.mxu0 %v403
    %v405 = vand.u32 %v71, 4294901760
    %v406 = vsub.f32 %v71, %v405
    %v407 = vand.u32 %v406, 4294901760
    %408 = vmatpush.msra.mxu0 %v407
    %v409 = vand.u32 %v70, 4294901760
    %v410 = vsub.f32 %v70, %v409
    %v411 = vand.u32 %v410, 4294901760
    %412 = vmatpush.msra.mxu0 %v411
    %v413 = vand.u32 %v69, 4294901760
    %v414 = vsub.f32 %v69, %v413
    %v415 = vand.u32 %v414, 4294901760
    %416 = vmatpush.msra.mxu0 %v415
    %v417 = vand.u32 %v68, 4294901760
    %v418 = vsub.f32 %v68, %v417
    %v419 = vand.u32 %v418, 4294901760
    %420 = vmatpush.msra.mxu0 %v419
    %v421 = vand.u32 %v67, 4294901760
    %v422 = vsub.f32 %v67, %v421
    %v423 = vand.u32 %v422, 4294901760
    %424 = vmatpush.msra.mxu0 %v423
    %v425 = vand.u32 %v66, 4294901760
    %v426 = vsub.f32 %v66, %v425
    %v427 = vand.u32 %v426, 4294901760
    %428 = vmatpush.msra.mxu0 %v427
    %v429 = vand.u32 %v65, 4294901760
    %v430 = vsub.f32 %v65, %v429
    %v431 = vand.u32 %v430, 4294901760
    %432 = vmatpush.msra.mxu0 %v431
    %v433 = vand.u32 %v64, 4294901760
    %v434 = vsub.f32 %v64, %v433
    %v435 = vand.u32 %v434, 4294901760
    %436 = vmatpush.msra.mxu0 %v435
    %v437 = vand.u32 %v63, 4294901760
    %v438 = vsub.f32 %v63, %v437
    %v439 = vand.u32 %v438, 4294901760
    %440 = vmatpush.msra.mxu0 %v439
    %v441 = vand.u32 %v62, 4294901760
    %v442 = vsub.f32 %v62, %v441
    %v443 = vand.u32 %v442, 4294901760
    %444 = vmatpush.msra.mxu0 %v443
    %v445 = vand.u32 %v61, 4294901760
    %v446 = vsub.f32 %v61, %v445
    %v447 = vand.u32 %v446, 4294901760
    %448 = vmatpush.msra.mxu0 %v447
    %v449 = vand.u32 %v77, 4294901760
    %450 = vmatmul.f32.gmra.mxu0 %v449
    %v451 = vpop.f32.mrf.mxu0
    %v452 = vadd.f32 %v365, %v451
    %v453 = vand.u32 %v78, 4294901760
    %454 = vmatmul.f32.gmra.mxu0 %v453
    %v455 = vpop.f32.mrf.mxu0
    %v456 = vadd.f32 %v371, %v455
    %v457 = vand.u32 %v79, 4294901760
    %458 = vmatmul.f32.gmra.mxu0 %v457
    %v459 = vpop.f32.mrf.mxu0
    %v460 = vadd.f32 %v377, %v459
    %v461 = vand.u32 %v80, 4294901760
    %462 = vmatmul.f32.gmra.mxu0 %v461
    %v463 = vpop.f32.mrf.mxu0
    %v464 = vadd.f32 %v383, %v463
    %465 = vdwg.mxu0
    %v466 = vand.u32 %v76, 4294901760
    %467 = vmatpush.msra.mxu0 %v466
    %v468 = vand.u32 %v75, 4294901760
    %469 = vmatpush.msra.mxu0 %v468
    %v470 = vand.u32 %v74, 4294901760
    %471 = vmatpush.msra.mxu0 %v470
    %v472 = vand.u32 %v73, 4294901760
    %473 = vmatpush.msra.mxu0 %v472
    %v474 = vand.u32 %v72, 4294901760
    %475 = vmatpush.msra.mxu0 %v474
    %v476 = vand.u32 %v71, 4294901760
    %477 = vmatpush.msra.mxu0 %v476
    %v478 = vand.u32 %v70, 4294901760
    %479 = vmatpush.msra.mxu0 %v478
    %v480 = vand.u32 %v69, 4294901760
    %481 = vmatpush.msra.mxu0 %v480
    %v482 = vand.u32 %v68, 4294901760
    %483 = vmatpush.msra.mxu0 %v482
    %v484 = vand.u32 %v67, 4294901760
    %485 = vmatpush.msra.mxu0 %v484
    %v486 = vand.u32 %v66, 4294901760
    %487 = vmatpush.msra.mxu0 %v486
    %v488 = vand.u32 %v65, 4294901760
    %489 = vmatpush.msra.mxu0 %v488
    %v490 = vand.u32 %v64, 4294901760
    %491 = vmatpush.msra.mxu0 %v490
    %v492 = vand.u32 %v63, 4294901760
    %493 = vmatpush.msra.mxu0 %v492
    %v494 = vand.u32 %v62, 4294901760
    %495 = vmatpush.msra.mxu0 %v494
    %v496 = vand.u32 %v61, 4294901760
    %497 = vmatpush.msra.mxu0 %v496
    %v498 = vand.u32 %v77, 4294901760
    %499 = vmatmul.f32.gmra.mxu0 %v498
    %v500 = vpop.f32.mrf.mxu0
    %v501 = vadd.f32 %v452, %v500
    %v502 = vand.u32 %v78, 4294901760
    %503 = vmatmul.f32.gmra.mxu0 %v502
    %v504 = vpop.f32.mrf.mxu0
    %v505 = vadd.f32 %v456, %v504
    %v506 = vand.u32 %v79, 4294901760
    %507 = vmatmul.f32.gmra.mxu0 %v506
    %v508 = vpop.f32.mrf.mxu0
    %v509 = vadd.f32 %v460, %v508
    %v510 = vand.u32 %v80, 4294901760
    %511 = vmatmul.f32.gmra.mxu0 %v510
    %v512 = vpop.f32.mrf.mxu0
    %v513 = vadd.f32 %v464, %v512
    %514 = vdwg.mxu0
    %v515 = vmul.f32 %v77, %v77
    %v516 = vmul.f32 %v78, %v78
    %v517 = vmul.f32 %v79, %v79
    %v518 = vmul.f32 %v80, %v80
    %v519 = vand.u32 %v76, 4294901760
    %520 = vmatpush.msra.mxu0 %v519
    %v521 = vand.u32 %v75, 4294901760
    %522 = vmatpush.msra.mxu0 %v521
    %v523 = vand.u32 %v74, 4294901760
    %524 = vmatpush.msra.mxu0 %v523
    %v525 = vand.u32 %v73, 4294901760
    %526 = vmatpush.msra.mxu0 %v525
    %v527 = vand.u32 %v72, 4294901760
    %528 = vmatpush.msra.mxu0 %v527
    %v529 = vand.u32 %v71, 4294901760
    %530 = vmatpush.msra.mxu0 %v529
    %v531 = vand.u32 %v70, 4294901760
    %532 = vmatpush.msra.mxu0 %v531
    %v533 = vand.u32 %v69, 4294901760
    %534 = vmatpush.msra.mxu0 %v533
    %v535 = vand.u32 %v68, 4294901760
    %536 = vmatpush.msra.mxu0 %v535
    %v537 = vand.u32 %v67, 4294901760
    %538 = vmatpush.msra.mxu0 %v537
    %v539 = vand.u32 %v66, 4294901760
    %540 = vmatpush.msra.mxu0 %v539
    %v541 = vand.u32 %v65, 4294901760
    %542 = vmatpush.msra.mxu0 %v541
    %v543 = vand.u32 %v64, 4294901760
    %544 = vmatpush.msra.mxu0 %v543
    %v545 = vand.u32 %v63, 4294901760
    %546 = vmatpush.msra.mxu0 %v545
    %v547 = vand.u32 %v62, 4294901760
    %548 = vmatpush.msra.mxu0 %v547
    %v549 = vand.u32 %v61, 4294901760
    %550 = vmatpush.msra.mxu0 %v549
    %v551 = vand.u32 %v515, 4294901760
    %v552 = vsub.f32 %v515, %v551
    %v553 = vand.u32 %v552, 4294901760
    %v554 = vsub.f32 %v552, %v553
    %v555 = vand.u32 %v554, 4294901760
    %556 = vmatmul.f32.gmra.mxu0 %v555
    %v557 = vpop.f32.mrf.mxu0
    %v558 = vadd.f32 0.0, %v557
    %v559 = vand.u32 %v516, 4294901760
    %v560 = vsub.f32 %v516, %v559
    %v561 = vand.u32 %v560, 4294901760
    %v562 = vsub.f32 %v560, %v561
    %v563 = vand.u32 %v562, 4294901760
    %564 = vmatmul.f32.gmra.mxu0 %v563
    %v565 = vpop.f32.mrf.mxu0
    %v566 = vadd.f32 0.0, %v565
    %v567 = vand.u32 %v517, 4294901760
    %v568 = vsub.f32 %v517, %v567
    %v569 = vand.u32 %v568, 4294901760
    %v570 = vsub.f32 %v568, %v569
    %v571 = vand.u32 %v570, 4294901760
    %572 = vmatmul.f32.gmra.mxu0 %v571
    %v573 = vpop.f32.mrf.mxu0
    %v574 = vadd.f32 0.0, %v573
    %v575 = vand.u32 %v518, 4294901760
    %v576 = vsub.f32 %v518, %v575
    %v577 = vand.u32 %v576, 4294901760
    %v578 = vsub.f32 %v576, %v577
    %v579 = vand.u32 %v578, 4294901760
    %580 = vmatmul.f32.gmra.mxu0 %v579
    %v581 = vpop.f32.mrf.mxu0
    %v582 = vadd.f32 0.0, %v581
    %583 = vdwg.mxu0
    %v584 = vand.u32 %v76, 4294901760
    %v585 = vsub.f32 %v76, %v584
    %v586 = vand.u32 %v585, 4294901760
    %v587 = vsub.f32 %v585, %v586
    %v588 = vand.u32 %v587, 4294901760
    %589 = vmatpush.msra.mxu0 %v588
    %v590 = vand.u32 %v75, 4294901760
    %v591 = vsub.f32 %v75, %v590
    %v592 = vand.u32 %v591, 4294901760
    %v593 = vsub.f32 %v591, %v592
    %v594 = vand.u32 %v593, 4294901760
    %595 = vmatpush.msra.mxu0 %v594
    %v596 = vand.u32 %v74, 4294901760
    %v597 = vsub.f32 %v74, %v596
    %v598 = vand.u32 %v597, 4294901760
    %v599 = vsub.f32 %v597, %v598
    %v600 = vand.u32 %v599, 4294901760
    %601 = vmatpush.msra.mxu0 %v600
    %v602 = vand.u32 %v73, 4294901760
    %v603 = vsub.f32 %v73, %v602
    %v604 = vand.u32 %v603, 4294901760
    %v605 = vsub.f32 %v603, %v604
    %v606 = vand.u32 %v605, 4294901760
    %607 = vmatpush.msra.mxu0 %v606
    %v608 = vand.u32 %v72, 4294901760
    %v609 = vsub.f32 %v72, %v608
    %v610 = vand.u32 %v609, 4294901760
    %v611 = vsub.f32 %v609, %v610
    %v612 = vand.u32 %v611, 4294901760
    %613 = vmatpush.msra.mxu0 %v612
    %v614 = vand.u32 %v71, 4294901760
    %v615 = vsub.f32 %v71, %v614
    %v616 = vand.u32 %v615, 4294901760
    %v617 = vsub.f32 %v615, %v616
    %v618 = vand.u32 %v617, 4294901760
    %619 = vmatpush.msra.mxu0 %v618
    %v620 = vand.u32 %v70, 4294901760
    %v621 = vsub.f32 %v70, %v620
    %v622 = vand.u32 %v621, 4294901760
    %v623 = vsub.f32 %v621, %v622
    %v624 = vand.u32 %v623, 4294901760
    %625 = vmatpush.msra.mxu0 %v624
    %v626 = vand.u32 %v69, 4294901760
    %v627 = vsub.f32 %v69, %v626
    %v628 = vand.u32 %v627, 4294901760
    %v629 = vsub.f32 %v627, %v628
    %v630 = vand.u32 %v629, 4294901760
    %631 = vmatpush.msra.mxu0 %v630
    %v632 = vand.u32 %v68, 4294901760
    %v633 = vsub.f32 %v68, %v632
    %v634 = vand.u32 %v633, 4294901760
    %v635 = vsub.f32 %v633, %v634
    %v636 = vand.u32 %v635, 4294901760
    %637 = vmatpush.msra.mxu0 %v636
    %v638 = vand.u32 %v67, 4294901760
    %v639 = vsub.f32 %v67, %v638
    %v640 = vand.u32 %v639, 4294901760
    %v641 = vsub.f32 %v639, %v640
    %v642 = vand.u32 %v641, 4294901760
    %643 = vmatpush.msra.mxu0 %v642
    %v644 = vand.u32 %v66, 4294901760
    %v645 = vsub.f32 %v66, %v644
    %v646 = vand.u32 %v645, 4294901760
    %v647 = vsub.f32 %v645, %v646
    %v648 = vand.u32 %v647, 4294901760
    %649 = vmatpush.msra.mxu0 %v648
    %v650 = vand.u32 %v65, 4294901760
    %v651 = vsub.f32 %v65, %v650
    %v652 = vand.u32 %v651, 4294901760
    %v653 = vsub.f32 %v651, %v652
    %v654 = vand.u32 %v653, 4294901760
    %655 = vmatpush.msra.mxu0 %v654
    %v656 = vand.u32 %v64, 4294901760
    %v657 = vsub.f32 %v64, %v656
    %v658 = vand.u32 %v657, 4294901760
    %v659 = vsub.f32 %v657, %v658
    %v660 = vand.u32 %v659, 4294901760
    %661 = vmatpush.msra.mxu0 %v660
    %v662 = vand.u32 %v63, 4294901760
    %v663 = vsub.f32 %v63, %v662
    %v664 = vand.u32 %v663, 4294901760
    %v665 = vsub.f32 %v663, %v664
    %v666 = vand.u32 %v665, 4294901760
    %667 = vmatpush.msra.mxu0 %v666
    %v668 = vand.u32 %v62, 4294901760
    %v669 = vsub.f32 %v62, %v668
    %v670 = vand.u32 %v669, 4294901760
    %v671 = vsub.f32 %v669, %v670
    %v672 = vand.u32 %v671, 4294901760
    %673 = vmatpush.msra.mxu0 %v672
    %v674 = vand.u32 %v61, 4294901760
    %v675 = vsub.f32 %v61, %v674
    %v676 = vand.u32 %v675, 4294901760
    %v677 = vsub.f32 %v675, %v676
    %v678 = vand.u32 %v677, 4294901760
    %679 = vmatpush.msra.mxu0 %v678
    %v680 = vand.u32 %v515, 4294901760
    %681 = vmatmul.f32.gmra.mxu0 %v680
    %v682 = vpop.f32.mrf.mxu0
    %v683 = vadd.f32 %v558, %v682
    %v684 = vand.u32 %v516, 4294901760
    %685 = vmatmul.f32.gmra.mxu0 %v684
    %v686 = vpop.f32.mrf.mxu0
    %v687 = vadd.f32 %v566, %v686
    %v688 = vand.u32 %v517, 4294901760
    %689 = vmatmul.f32.gmra.mxu0 %v688
    %v690 = vpop.f32.mrf.mxu0
    %v691 = vadd.f32 %v574, %v690
    %v692 = vand.u32 %v518, 4294901760
    %693 = vmatmul.f32.gmra.mxu0 %v692
    %v694 = vpop.f32.mrf.mxu0
    %v695 = vadd.f32 %v582, %v694
    %696 = vdwg.mxu0
    %v697 = vand.u32 %v76, 4294901760
    %v698 = vsub.f32 %v76, %v697
    %699 = vmatpush.msra.mxu0 %v698
    %v700 = vand.u32 %v75, 4294901760
    %v701 = vsub.f32 %v75, %v700
    %702 = vmatpush.msra.mxu0 %v701
    %v703 = vand.u32 %v74, 4294901760
    %v704 = vsub.f32 %v74, %v703
    %705 = vmatpush.msra.mxu0 %v704
    %v706 = vand.u32 %v73, 4294901760
    %v707 = vsub.f32 %v73, %v706
    %708 = vmatpush.msra.mxu0 %v707
    %v709 = vand.u32 %v72, 4294901760
    %v710 = vsub.f32 %v72, %v709
    %711 = vmatpush.msra.mxu0 %v710
    %v712 = vand.u32 %v71, 4294901760
    %v713 = vsub.f32 %v71, %v712
    %714 = vmatpush.msra.mxu0 %v713
    %v715 = vand.u32 %v70, 4294901760
    %v716 = vsub.f32 %v70, %v715
    %717 = vmatpush.msra.mxu0 %v716
    %v718 = vand.u32 %v69, 4294901760
    %v719 = vsub.f32 %v69, %v718
    %720 = vmatpush.msra.mxu0 %v719
    %v721 = vand.u32 %v68, 4294901760
    %v722 = vsub.f32 %v68, %v721
    %723 = vmatpush.msra.mxu0 %v722
    %v724 = vand.u32 %v67, 4294901760
    %v725 = vsub.f32 %v67, %v724
    %726 = vmatpush.msra.mxu0 %v725
    %v727 = vand.u32 %v66, 4294901760
    %v728 = vsub.f32 %v66, %v727
    %729 = vmatpush.msra.mxu0 %v728
    %v730 = vand.u32 %v65, 4294901760
    %v731 = vsub.f32 %v65, %v730
    %732 = vmatpush.msra.mxu0 %v731
    %v733 = vand.u32 %v64, 4294901760
    %v734 = vsub.f32 %v64, %v733
    %735 = vmatpush.msra.mxu0 %v734
    %v736 = vand.u32 %v63, 4294901760
    %v737 = vsub.f32 %v63, %v736
    %738 = vmatpush.msra.mxu0 %v737
    %v739 = vand.u32 %v62, 4294901760
    %v740 = vsub.f32 %v62, %v739
    %741 = vmatpush.msra.mxu0 %v740
    %v742 = vand.u32 %v61, 4294901760
    %v743 = vsub.f32 %v61, %v742
    %744 = vmatpush.msra.mxu0 %v743
    %v745 = vand.u32 %v515, 4294901760
    %v746 = vsub.f32 %v515, %v745
    %747 = vmatmul.f32.gmra.mxu0 %v746
    %v748 = vpop.f32.mrf.mxu0
    %v749 = vadd.f32 %v683, %v748
    %v750 = vand.u32 %v516, 4294901760
    %v751 = vsub.f32 %v516, %v750
    %752 = vmatmul.f32.gmra.mxu0 %v751
    %v753 = vpop.f32.mrf.mxu0
    %v754 = vadd.f32 %v687, %v753
    %v755 = vand.u32 %v517, 4294901760
    %v756 = vsub.f32 %v517, %v755
    %757 = vmatmul.f32.gmra.mxu0 %v756
    %v758 = vpop.f32.mrf.mxu0
    %v759 = vadd.f32 %v691, %v758
    %v760 = vand.u32 %v518, 4294901760
    %v761 = vsub.f32 %v518, %v760
    %762 = vmatmul.f32.gmra.mxu0 %v761
    %v763 = vpop.f32.mrf.mxu0
    %v764 = vadd.f32 %v695, %v763
    %765 = vdwg.mxu0
    %v766 = vand.u32 %v76, 4294901760
    %767 = vmatpush.msra.mxu0 %v766
    %v768 = vand.u32 %v75, 4294901760
    %769 = vmatpush.msra.mxu0 %v768
    %v770 = vand.u32 %v74, 4294901760
    %771 = vmatpush.msra.mxu0 %v770
    %v772 = vand.u32 %v73, 4294901760
    %773 = vmatpush.msra.mxu0 %v772
    %v774 = vand.u32 %v72, 4294901760
    %775 = vmatpush.msra.mxu0 %v774
    %v776 = vand.u32 %v71, 4294901760
    %777 = vmatpush.msra.mxu0 %v776
    %v778 = vand.u32 %v70, 4294901760
    %779 = vmatpush.msra.mxu0 %v778
    %v780 = vand.u32 %v69, 4294901760
    %781 = vmatpush.msra.mxu0 %v780
    %v782 = vand.u32 %v68, 4294901760
    %783 = vmatpush.msra.mxu0 %v782
    %v784 = vand.u32 %v67, 4294901760
    %785 = vmatpush.msra.mxu0 %v784
    %v786 = vand.u32 %v66, 4294901760
    %787 = vmatpush.msra.mxu0 %v786
    %v788 = vand.u32 %v65, 4294901760
    %789 = vmatpush.msra.mxu0 %v788
    %v790 = vand.u32 %v64, 4294901760
    %791 = vmatpush.msra.mxu0 %v790
    %v792 = vand.u32 %v63, 4294901760
    %793 = vmatpush.msra.mxu0 %v792
    %v794 = vand.u32 %v62, 4294901760
    %795 = vmatpush.msra.mxu0 %v794
    %v796 = vand.u32 %v61, 4294901760
    %797 = vmatpush.msra.mxu0 %v796
    %v798 = vand.u32 %v515, 4294901760
    %v799 = vsub.f32 %v515, %v798
    %v800 = vand.u32 %v799, 4294901760
    %801 = vmatmul.f32.gmra.mxu0 %v800
    %v802 = vpop.f32.mrf.mxu0
    %v803 = vadd.f32 %v749, %v802
    %v804 = vand.u32 %v516, 4294901760
    %v805 = vsub.f32 %v516, %v804
    %v806 = vand.u32 %v805, 4294901760
    %807 = vmatmul.f32.gmra.mxu0 %v806
    %v808 = vpop.f32.mrf.mxu0
    %v809 = vadd.f32 %v754, %v808
    %v810 = vand.u32 %v517, 4294901760
    %v811 = vsub.f32 %v517, %v810
    %v812 = vand.u32 %v811, 4294901760
    %813 = vmatmul.f32.gmra.mxu0 %v812
    %v814 = vpop.f32.mrf.mxu0
    %v815 = vadd.f32 %v759, %v814
    %v816 = vand.u32 %v518, 4294901760
    %v817 = vsub.f32 %v518, %v816
    %v818 = vand.u32 %v817, 4294901760
    %819 = vmatmul.f32.gmra.mxu0 %v818
    %v820 = vpop.f32.mrf.mxu0
    %v821 = vadd.f32 %v764, %v820
    %822 = vdwg.mxu0
    %v823 = vand.u32 %v76, 4294901760
    %v824 = vsub.f32 %v76, %v823
    %v825 = vand.u32 %v824, 4294901760
    %826 = vmatpush.msra.mxu0 %v825
    %v827 = vand.u32 %v75, 4294901760
    %v828 = vsub.f32 %v75, %v827
    %v829 = vand.u32 %v828, 4294901760
    %830 = vmatpush.msra.mxu0 %v829
    %v831 = vand.u32 %v74, 4294901760
    %v832 = vsub.f32 %v74, %v831
    %v833 = vand.u32 %v832, 4294901760
    %834 = vmatpush.msra.mxu0 %v833
    %v835 = vand.u32 %v73, 4294901760
    %v836 = vsub.f32 %v73, %v835
    %v837 = vand.u32 %v836, 4294901760
    %838 = vmatpush.msra.mxu0 %v837
    %v839 = vand.u32 %v72, 4294901760
    %v840 = vsub.f32 %v72, %v839
    %v841 = vand.u32 %v840, 4294901760
    %842 = vmatpush.msra.mxu0 %v841
    %v843 = vand.u32 %v71, 4294901760
    %v844 = vsub.f32 %v71, %v843
    %v845 = vand.u32 %v844, 4294901760
    %846 = vmatpush.msra.mxu0 %v845
    %v847 = vand.u32 %v70, 4294901760
    %v848 = vsub.f32 %v70, %v847
    %v849 = vand.u32 %v848, 4294901760
    %850 = vmatpush.msra.mxu0 %v849
    %v851 = vand.u32 %v69, 4294901760
    %v852 = vsub.f32 %v69, %v851
    %v853 = vand.u32 %v852, 4294901760
    %854 = vmatpush.msra.mxu0 %v853
    %v855 = vand.u32 %v68, 4294901760
    %v856 = vsub.f32 %v68, %v855
    %v857 = vand.u32 %v856, 4294901760
    %858 = vmatpush.msra.mxu0 %v857
    %v859 = vand.u32 %v67, 4294901760
    %v860 = vsub.f32 %v67, %v859
    %v861 = vand.u32 %v860, 4294901760
    %862 = vmatpush.msra.mxu0 %v861
    %v863 = vand.u32 %v66, 4294901760
    %v864 = vsub.f32 %v66, %v863
    %v865 = vand.u32 %v864, 4294901760
    %866 = vmatpush.msra.mxu0 %v865
    %v867 = vand.u32 %v65, 4294901760
    %v868 = vsub.f32 %v65, %v867
    %v869 = vand.u32 %v868, 4294901760
    %870 = vmatpush.msra.mxu0 %v869
    %v871 = vand.u32 %v64, 4294901760
    %v872 = vsub.f32 %v64, %v871
    %v873 = vand.u32 %v872, 4294901760
    %874 = vmatpush.msra.mxu0 %v873
    %v875 = vand.u32 %v63, 4294901760
    %v876 = vsub.f32 %v63, %v875
    %v877 = vand.u32 %v876, 4294901760
    %878 = vmatpush.msra.mxu0 %v877
    %v879 = vand.u32 %v62, 4294901760
    %v880 = vsub.f32 %v62, %v879
    %v881 = vand.u32 %v880, 4294901760
    %882 = vmatpush.msra.mxu0 %v881
    %v883 = vand.u32 %v61, 4294901760
    %v884 = vsub.f32 %v61, %v883
    %v885 = vand.u32 %v884, 4294901760
    %886 = vmatpush.msra.mxu0 %v885
    %v887 = vand.u32 %v515, 4294901760
    %888 = vmatmul.f32.gmra.mxu0 %v887
    %v889 = vpop.f32.mrf.mxu0
    %v890 = vadd.f32 %v803, %v889
    %v891 = vand.u32 %v516, 4294901760
    %892 = vmatmul.f32.gmra.mxu0 %v891
    %v893 = vpop.f32.mrf.mxu0
    %v894 = vadd.f32 %v809, %v893
    %v895 = vand.u32 %v517, 4294901760
    %896 = vmatmul.f32.gmra.mxu0 %v895
    %v897 = vpop.f32.mrf.mxu0
    %v898 = vadd.f32 %v815, %v897
    %v899 = vand.u32 %v518, 4294901760
    %900 = vmatmul.f32.gmra.mxu0 %v899
    %v901 = vpop.f32.mrf.mxu0
    %v902 = vadd.f32 %v821, %v901
    %903 = vdwg.mxu0
    %v904 = vand.u32 %v76, 4294901760
    %905 = vmatpush.msra.mxu0 %v904
    %v906 = vand.u32 %v75, 4294901760
    %907 = vmatpush.msra.mxu0 %v906
    %v908 = vand.u32 %v74, 4294901760
    %909 = vmatpush.msra.mxu0 %v908
    %v910 = vand.u32 %v73, 4294901760
    %911 = vmatpush.msra.mxu0 %v910
    %v912 = vand.u32 %v72, 4294901760
    %913 = vmatpush.msra.mxu0 %v912
    %v914 = vand.u32 %v71, 4294901760
    %915 = vmatpush.msra.mxu0 %v914
    %v916 = vand.u32 %v70, 4294901760
    %917 = vmatpush.msra.mxu0 %v916
    %v918 = vand.u32 %v69, 4294901760
    %919 = vmatpush.msra.mxu0 %v918
    %v920 = vand.u32 %v68, 4294901760
    %921 = vmatpush.msra.mxu0 %v920
    %v922 = vand.u32 %v67, 4294901760
    %923 = vmatpush.msra.mxu0 %v922
    %v924 = vand.u32 %v66, 4294901760
    %925 = vmatpush.msra.mxu0 %v924
    %v926 = vand.u32 %v65, 4294901760
    %927 = vmatpush.msra.mxu0 %v926
    %v928 = vand.u32 %v64, 4294901760
    %929 = vmatpush.msra.mxu0 %v928
    %v930 = vand.u32 %v63, 4294901760
    %931 = vmatpush.msra.mxu0 %v930
    %v932 = vand.u32 %v62, 4294901760
    %933 = vmatpush.msra.mxu0 %v932
    %v934 = vand.u32 %v61, 4294901760
    %935 = vmatpush.msra.mxu0 %v934
    %v936 = vand.u32 %v515, 4294901760
    %937 = vmatmul.f32.gmra.mxu0 %v936
    %v938 = vpop.f32.mrf.mxu0
    %v939 = vadd.f32 %v890, %v938
    %v940 = vand.u32 %v516, 4294901760
    %941 = vmatmul.f32.gmra.mxu0 %v940
    %v942 = vpop.f32.mrf.mxu0
    %v943 = vadd.f32 %v894, %v942
    %v944 = vand.u32 %v517, 4294901760
    %945 = vmatmul.f32.gmra.mxu0 %v944
    %v946 = vpop.f32.mrf.mxu0
    %v947 = vadd.f32 %v898, %v946
    %v948 = vand.u32 %v518, 4294901760
    %949 = vmatmul.f32.gmra.mxu0 %v948
    %v950 = vpop.f32.mrf.mxu0
    %v951 = vadd.f32 %v902, %v950
    %952 = vdwg.mxu0
    %v953 = vmul.f32 %v501, 0.03125
    %v954 = vmul.f32 %v505, 0.03125
    %v955 = vmul.f32 %v509, 0.03125
    %v956 = vmul.f32 %v513, 0.03125
    %v957 = vmul.f32 %v939, 0.03125
    %v958 = vmul.f32 %v943, 0.03125
    %v959 = vmul.f32 %v947, 0.03125
    %v960 = vmul.f32 %v951, 0.03125
    %v961 = vmul.f32 %v953, %v953
    %v962 = vmul.f32 %v954, %v954
    %v963 = vmul.f32 %v955, %v955
    %v964 = vmul.f32 %v956, %v956
    %v965 = vsub.f32 %v957, %v961
    %v966 = vsub.f32 %v958, %v962
    %v967 = vsub.f32 %v959, %v963
    %v968 = vsub.f32 %v960, %v964
    %v969 = vmax.f32 %v965, 0.0
    %v970 = vmax.f32 %v966, 0.0
    %v971 = vmax.f32 %v967, 0.0
    %v972 = vmax.f32 %v968, 0.0
    %v973 = vadd.f32 %v969, 1e-05
    %v974 = vadd.f32 %v970, 1e-05
    %v975 = vadd.f32 %v971, 1e-05
    %v976 = vadd.f32 %v972, 1e-05
    %v977 = vrsqrt.pop %v973
    %v978 = vmul.f32 %v977, %v973
    %v979 = vmul.f32 %v978, %v977
    %v980 = vmul.f32 0.5, %v979
    %v981 = vsub.f32 1.5, %v980
    %v982 = vmul.f32 %v977, %v981
    %vm983 = vweird.f32 %v973
    %vm984 = vweird.f32 %v977
    %vm985 = vmor %vm983, %vm984
    %v986 = vsel %vm985, %v977, %v982
    %v987 = vrsqrt.pop %v974
    %v988 = vmul.f32 %v987, %v974
    %v989 = vmul.f32 %v988, %v987
    %v990 = vmul.f32 0.5, %v989
    %v991 = vsub.f32 1.5, %v990
    %v992 = vmul.f32 %v987, %v991
    %vm993 = vweird.f32 %v974
    %vm994 = vweird.f32 %v987
    %vm995 = vmor %vm993, %vm994
    %v996 = vsel %vm995, %v987, %v992
    %v997 = vrsqrt.pop %v975
    %v998 = vmul.f32 %v997, %v975
    %v999 = vmul.f32 %v998, %v997
    %v1000 = vmul.f32 0.5, %v999
    %v1001 = vsub.f32 1.5, %v1000
    %v1002 = vmul.f32 %v997, %v1001
    %vm1003 = vweird.f32 %v975
    %vm1004 = vweird.f32 %v997
    %vm1005 = vmor %vm1003, %vm1004
    %v1006 = vsel %vm1005, %v997, %v1002
    %v1007 = vrsqrt.pop %v976
    %v1008 = vmul.f32 %v1007, %v976
    %v1009 = vmul.f32 %v1008, %v1007
    %v1010 = vmul.f32 0.5, %v1009
    %v1011 = vsub.f32 1.5, %v1010
    %v1012 = vmul.f32 %v1007, %v1011
    %vm1013 = vweird.f32 %v976
    %vm1014 = vweird.f32 %v1007
    %vm1015 = vmor %vm1013, %vm1014
    %v1016 = vsel %vm1015, %v1007, %v1012
    %v1018 = vperm.slane %v60, 0
    %v1020 = vmul.f32 %v986, %v1018
    %v1021 = vmul.f32 %v996, %v1018
    %v1022 = vmul.f32 %v1006, %v1018
    %v1023 = vmul.f32 %v1016, %v1018
    %v1024 = vmul.f32 %v77, %v1020
    %v1025 = vmul.f32 %v78, %v1021
    %v1026 = vmul.f32 %v79, %v1022
    %v1027 = vmul.f32 %v80, %v1023
    %1028 = vst [vmem:[#allocation8] sm:$0xff] %v1024
    %1029 = vst [vmem:[#allocation8 + $0x8] sm:$0xff] %v1025
    %1030 = vst [vmem:[#allocation8 + $0x10] sm:$0xff] %v1026
    %1031 = vst [vmem:[#allocation8 + $0x18] sm:$0xff] %v1027
    // Predicated region
    $region26: #{tpu_custom_call.1} parent=1 // pred_check
      _
    $region27: #{tpu_custom_call.1} parent=1 // pred_check_branch
      %1033 = sbr.rel (0) target = $region29
    $region28: #{tpu_custom_call.1} parent=1 // pred_region
      %1035 = vsyncadd [#allocation4], 0
      %s1036 = sshll.u32 [#allocation8], 4
      %s1037 = int_to_ptr.vmem [resolvable:$true] %s1036
      %s1038 = sshll.u32 %s3, 4
      %s1039 = int_to_ptr.hbm [resolvable:$true] %s1038
      %1044 = dma.vmem_to_hbm [thread:$0]  %s1037, 512, %s1039, [#allocation4], 128, 128, 8
    $region29: #{tpu_custom_call.1} parent=1 // pred_fallthru
      _
    // Predicated region
    $region30: #{tpu_custom_call.1} parent=1 // pred_check
      _
    $region31: #{tpu_custom_call.1} parent=1 // pred_check_branch
      %1046 = sbr.rel (0) target = $region33
    $region32: #{tpu_custom_call.1} parent=1 // pred_region
      %1048 = dma.done [#allocation4], 512
    $region33: #{tpu_custom_call.1} parent=1 // pred_fallthru
      _
    %1049 = vsyncpa [#allocation3], 1
    %1050 = vsyncpa [#allocation6], 1
    %1051 = vsyncpa [#allocation4], 1

</llo_original>
